<compile_context>
chip_gen: v6e
topology: v6e:2x2x1
jax: 0.10.0
libtpu: 0.0.40
codegen_flags: <defaults>
</compile_context>

<pallas_src>
import jax
import jax.numpy as jnp
from jax.experimental import pallas as pl
from jax.experimental.pallas import tpu as pltpu

OBS_SPACE = 24
ACT_SPACE = 4
HIDDEN = 256
LOG_STD_MIN = -20.0
LOG_STD_MAX = 2.0


def _round_up(x, m):
    return (x + m - 1) // m * m


def sac_actor_kernel(x_ref, w1_ref, b1_ref, w2_ref, b2_ref, wh_ref, bh_ref, out_ref):
    # fc1 + ReLU: bf16 x bf16 -> f32 accumulate on the MXU; elementwise stays f32.
    x = x_ref[...].astype(jnp.bfloat16)
    h1 = jnp.dot(x, w1_ref[...], preferred_element_type=jnp.float32) + b1_ref[...]
    h1 = jnp.maximum(h1, 0.0)

    # fc2 + ReLU (dominant 256x256 matmul, bf16 operands).
    h2 = jnp.dot(h1.astype(jnp.bfloat16), w2_ref[...],
                 preferred_element_type=jnp.float32) + b2_ref[...]
    h2 = jnp.maximum(h2, 0.0)

    # fused heads: columns [0, ACT) are mean, [ACT, 2*ACT) are log_std.
    heads = jnp.dot(h2.astype(jnp.bfloat16), wh_ref[...],
                    preferred_element_type=jnp.float32) + bh_ref[...]

    # clamp only the log_std half (lane mask on the fused output).
    col = jax.lax.broadcasted_iota(jnp.int32, heads.shape, 1)
    clamped = jnp.clip(heads, LOG_STD_MIN, LOG_STD_MAX)
    out_ref[...] = jnp.where(col >= ACT_SPACE, clamped, heads).astype(out_ref.dtype)


def sac_actor_forward(state, params, *, block_b=1024):
    """state: [B, OBS_SPACE] f32 -> (mean [B, ACT_SPACE] f32, log_std [B, ACT_SPACE] f32)."""
    w1, b1, w2, b2, wh, bh = params
    B = state.shape[0]

    # Batch tile: multiple of 8 (f32 sublane), capped by block_b. No input padding;
    # the ragged last block is masked by Pallas (rows are independent).
    bt = min(block_b, _round_up(B, 8))
    # v7x megacore: if a large-ish batch would run as a single grid step, shrink the
    # tile so the "parallel" batch axis has >= 2 steps to shard across TensorCores.
    if pl.cdiv(B, bt) == 1 and B > 16:
        bt = _round_up(pl.cdiv(B, 2), 8)
    grid = (pl.cdiv(B, bt),)

    def resident(arr):
        # Same block index every grid step -> weights/biases stay resident in VMEM.
        return pl.BlockSpec(arr.shape, lambda i: (0, 0))

    out = pl.pallas_call(
        sac_actor_kernel,
        out_shape=jax.ShapeDtypeStruct((B, 2 * ACT_SPACE), jnp.float32),
        grid=grid,
        in_specs=[
            pl.BlockSpec((bt, OBS_SPACE), lambda i: (i, 0)),
            resident(w1), resident(b1),
            resident(w2), resident(b2),
            resident(wh), resident(bh),
        ],
        out_specs=pl.BlockSpec((bt, 2 * ACT_SPACE), lambda i: (i, 0)),
        compiler_params=pltpu.CompilerParams(dimension_semantics=("parallel",)),
    )(state, w1, b1, w2, b2, wh, bh)

    mean = out[:, :ACT_SPACE]
    log_std = out[:, ACT_SPACE:]
    return mean, log_std


def init_params(key, weight_dtype=jnp.bfloat16):
    """nn.Linear-style init (U[-1/sqrt(fan_in), 1/sqrt(fan_in)]).
    Weights stored [in, out] (transposed vs PyTorch) in bf16; biases stay f32.
    The mean / log_std heads are fused (concatenated along out) at init time."""
    def linear(key, fan_in, fan_out):
        kw, kb = jax.random.split(key)
        bound = float(fan_in) ** -0.5
        w = jax.random.uniform(kw, (fan_in, fan_out), jnp.float32, -bound, bound)
        b = jax.random.uniform(kb, (1, fan_out), jnp.float32, -bound, bound)
        return w.astype(weight_dtype), b

    k1, k2, k3, k4 = jax.random.split(key, 4)
    w1, b1 = linear(k1, OBS_SPACE, HIDDEN)
    w2, b2 = linear(k2, HIDDEN, HIDDEN)
    wm, bm = linear(k3, HIDDEN, ACT_SPACE)
    ws, bs = linear(k4, HIDDEN, ACT_SPACE)
    wh = jnp.concatenate([wm, ws], axis=1)   # [HIDDEN, 2*ACT_SPACE], bf16
    bh = jnp.concatenate([bm, bs], axis=1)   # [1, 2*ACT_SPACE], f32
    return (w1, b1, w2, b2, wh, bh)


def reference_forward(state, params):
    """Pure-JAX reference with matching numerics (bf16 MXU operands, f32 accumulate)."""
    w1, b1, w2, b2, wh, bh = params
    bf = jnp.bfloat16
    h1 = jnp.maximum(
        jnp.dot(state.astype(bf), w1, preferred_element_type=jnp.float32) + b1, 0.0)
    h2 = jnp.maximum(
        jnp.dot(h1.astype(bf), w2, preferred_element_type=jnp.float32) + b2, 0.0)
    heads = jnp.dot(h2.astype(bf), wh, preferred_element_type=jnp.float32) + bh
    mean = heads[:, :ACT_SPACE]
    log_std = jnp.clip(heads[:, ACT_SPACE:], LOG_STD_MIN, LOG_STD_MAX)
    return mean, log_std


if __name__ == "__main__":
    key = jax.random.PRNGKey(0)
    kp, kx = jax.random.split(key)

    params = init_params(kp)

    # Small demo batch.
    batch = 8
    state = jax.random.normal(kx, (batch, OBS_SPACE), jnp.float32)

    fwd = jax.jit(sac_actor_forward, static_argnames=("block_b",))
    mean, log_std = fwd(state, params)
    jax.block_until_ready((mean, log_std))

    mean_ref, log_std_ref = reference_forward(state, params)
    assert mean.shape == (batch, ACT_SPACE)
    assert log_std.shape == (batch, ACT_SPACE)
    assert jnp.allclose(mean, mean_ref, atol=2e-3, rtol=2e-3)
    assert jnp.allclose(log_std, log_std_ref, atol=2e-3, rtol=2e-3)

    # Exercise the multi-step batch grid (ragged last tile + resident weights + megacore split).
    big_batch = 300
    state_big = jax.random.normal(jax.random.PRNGKey(1), (big_batch, OBS_SPACE), jnp.float32)
    mean_b, log_std_b = fwd(state_big, params)   # splits into 2 batch tiles (152 + 148)
    jax.block_until_ready((mean_b, log_std_b))
    mean_bref, log_std_bref = reference_forward(state_big, params)
    assert mean_b.shape == (big_batch, ACT_SPACE)
    assert jnp.allclose(mean_b, mean_bref, atol=2e-3, rtol=2e-3)
    assert jnp.allclose(log_std_b, log_std_bref, atol=2e-3, rtol=2e-3)

    # TODO(synk): sample() (rsample + tanh squash + log_prob) should be fused into this
    # same kernel using pltpu.prng_seed / pltpu.stateful_normal; only forward() is here.
    print("KERNEL_OK")
</pallas_src>

<mosaic_0001>
module attributes {stable_mosaic.version = 11 : i64} {
  func.func @sac_actor_kernel(%arg0: i32, %arg1: memref<8x24xf32, #tpu.memory_space<vmem>>, %arg2: memref<24x256xbf16, #tpu.memory_space<vmem>>, %arg3: memref<1x256xf32, #tpu.memory_space<vmem>>, %arg4: memref<256x256xbf16, #tpu.memory_space<vmem>>, %arg5: memref<1x256xf32, #tpu.memory_space<vmem>>, %arg6: memref<256x8xbf16, #tpu.memory_space<vmem>>, %arg7: memref<1x8xf32, #tpu.memory_space<vmem>>, %arg8: memref<8x8xf32, #tpu.memory_space<vmem>>) attributes {dimension_semantics = [#tpu.dimension_semantics<parallel>], iteration_bounds = array<i64: 1>, scalar_prefetch = 0 : i64, scratch_operands = 0 : i64, tpu.core_type = #tpu.core_type<tc>, window_params = [{transform_indices = @transform_0, window_bounds = array<i64: 8, 24>}, {pipeline_mode = #tpu.pipeline_mode<synchronous>, transform_indices = @transform_1, window_bounds = array<i64: 24, 256>}, {pipeline_mode = #tpu.pipeline_mode<synchronous>, transform_indices = @transform_2, window_bounds = array<i64: 1, 256>}, {pipeline_mode = #tpu.pipeline_mode<synchronous>, transform_indices = @transform_3, window_bounds = array<i64: 256, 256>}, {pipeline_mode = #tpu.pipeline_mode<synchronous>, transform_indices = @transform_4, window_bounds = array<i64: 1, 256>}, {pipeline_mode = #tpu.pipeline_mode<synchronous>, transform_indices = @transform_5, window_bounds = array<i64: 256, 8>}, {pipeline_mode = #tpu.pipeline_mode<synchronous>, transform_indices = @transform_6, window_bounds = array<i64: 1, 8>}, {transform_indices = @transform_7, window_bounds = array<i64: 8, 8>}]} {
    %c0 = arith.constant 0 : index
    %c0_0 = arith.constant 0 : index
    %0 = vector.load %arg1[%c0, %c0_0] : memref<8x24xf32, #tpu.memory_space<vmem>>, vector<8x24xf32>
    %1 = arith.truncf %0 : vector<8x24xf32> to vector<8x24xbf16>
    %c0_1 = arith.constant 0 : index
    %c0_2 = arith.constant 0 : index
    %2 = vector.load %arg2[%c0_1, %c0_2] : memref<24x256xbf16, #tpu.memory_space<vmem>>, vector<24x256xbf16>
    %cst = arith.constant dense<0.000000e+00> : vector<8x256xf32>
    %3 = tpu.matmul %1, %2, %cst {dimension_numbers = #tpu.dot_dimension_numbers<[1], [0], [0], [1], [0, 0, 1, 1], [], []>} : vector<8x24xbf16>, vector<24x256xbf16>, vector<8x256xf32> -> vector<8x256xf32>
    %c0_3 = arith.constant 0 : index
    %c0_4 = arith.constant 0 : index
    %4 = vector.load %arg3[%c0_3, %c0_4] : memref<1x256xf32, #tpu.memory_space<vmem>>, vector<1x256xf32>
    %5 = vector.broadcast %4 : vector<1x256xf32> to vector<8x256xf32>
    %6 = arith.addf %3, %5 : vector<8x256xf32>
    %cst_5 = arith.constant 0.000000e+00 : f32
    %7 = vector.broadcast %cst_5 : f32 to vector<8x256xf32>
    %8 = arith.maximumf %6, %7 : vector<8x256xf32>
    %9 = arith.truncf %8 : vector<8x256xf32> to vector<8x256xbf16>
    %c0_6 = arith.constant 0 : index
    %c0_7 = arith.constant 0 : index
    %10 = vector.load %arg4[%c0_6, %c0_7] : memref<256x256xbf16, #tpu.memory_space<vmem>>, vector<256x256xbf16>
    %cst_8 = arith.constant dense<0.000000e+00> : vector<8x256xf32>
    %11 = tpu.matmul %9, %10, %cst_8 {dimension_numbers = #tpu.dot_dimension_numbers<[1], [0], [0], [1], [0, 0, 1, 1], [], []>} : vector<8x256xbf16>, vector<256x256xbf16>, vector<8x256xf32> -> vector<8x256xf32>
    %c0_9 = arith.constant 0 : index
    %c0_10 = arith.constant 0 : index
    %12 = vector.load %arg5[%c0_9, %c0_10] : memref<1x256xf32, #tpu.memory_space<vmem>>, vector<1x256xf32>
    %13 = vector.broadcast %12 : vector<1x256xf32> to vector<8x256xf32>
    %14 = arith.addf %11, %13 : vector<8x256xf32>
    %cst_11 = arith.constant 0.000000e+00 : f32
    %15 = vector.broadcast %cst_11 : f32 to vector<8x256xf32>
    %16 = arith.maximumf %14, %15 : vector<8x256xf32>
    %17 = arith.truncf %16 : vector<8x256xf32> to vector<8x256xbf16>
    %c0_12 = arith.constant 0 : index
    %c0_13 = arith.constant 0 : index
    %18 = vector.load %arg6[%c0_12, %c0_13] : memref<256x8xbf16, #tpu.memory_space<vmem>>, vector<256x8xbf16>
    %cst_14 = arith.constant dense<0.000000e+00> : vector<8x8xf32>
    %19 = tpu.matmul %17, %18, %cst_14 {dimension_numbers = #tpu.dot_dimension_numbers<[1], [0], [0], [1], [0, 0, 1, 1], [], []>} : vector<8x256xbf16>, vector<256x8xbf16>, vector<8x8xf32> -> vector<8x8xf32>
    %c0_15 = arith.constant 0 : index
    %c0_16 = arith.constant 0 : index
    %20 = vector.load %arg7[%c0_15, %c0_16] : memref<1x8xf32, #tpu.memory_space<vmem>>, vector<1x8xf32>
    %21 = vector.broadcast %20 : vector<1x8xf32> to vector<8x8xf32>
    %22 = arith.addf %19, %21 : vector<8x8xf32>
    %23 = tpu.iota {dimensions = array<i32: 1>} : vector<8x8xi32>
    %cst_17 = arith.constant -2.000000e+01 : f32
    %cst_18 = arith.constant 2.000000e+00 : f32
    %24 = vector.broadcast %cst_17 : f32 to vector<8x8xf32>
    %25 = arith.maximumf %24, %22 : vector<8x8xf32>
    %26 = vector.broadcast %cst_18 : f32 to vector<8x8xf32>
    %27 = arith.minimumf %26, %25 : vector<8x8xf32>
    %c4_i32 = arith.constant 4 : i32
    %28 = vector.broadcast %c4_i32 : i32 to vector<8x8xi32>
    %29 = arith.cmpi sge, %23, %28 : vector<8x8xi32>
    %30 = arith.select %29, %27, %22 : vector<8x8xi1>, vector<8x8xf32>
    %c0_19 = arith.constant 0 : index
    %c0_20 = arith.constant 0 : index
    %31 = vector.load %arg8[%c0_19, %c0_20] : memref<8x8xf32, #tpu.memory_space<vmem>>, vector<8x8xf32>
    tpu.vector_store %arg8[%c0_19, %c0_20], %30 {strides = array<i32>} : memref<8x8xf32, #tpu.memory_space<vmem>>, vector<8x8xf32>,
    return
  }
  func.func @transform_0(%arg0: i32) -> (i32, i32) {
    %c0_i32 = arith.constant 0 : i32
    %c0_i32_0 = arith.constant 0 : i32
    return %arg0, %c0_i32 : i32, i32
  }
  func.func @transform_1(%arg0: i32) -> (i32, i32) {
    %c0_i32 = arith.constant 0 : i32
    %c0_i32_0 = arith.constant 0 : i32
    %c0_i32_1 = arith.constant 0 : i32
    return %c0_i32, %c0_i32_0 : i32, i32
  }
  func.func @transform_2(%arg0: i32) -> (i32, i32) {
    %c0_i32 = arith.constant 0 : i32
    %c0_i32_0 = arith.constant 0 : i32
    %c0_i32_1 = arith.constant 0 : i32
    return %c0_i32, %c0_i32_0 : i32, i32
  }
  func.func @transform_3(%arg0: i32) -> (i32, i32) {
    %c0_i32 = arith.constant 0 : i32
    %c0_i32_0 = arith.constant 0 : i32
    %c0_i32_1 = arith.constant 0 : i32
    return %c0_i32, %c0_i32_0 : i32, i32
  }
  func.func @transform_4(%arg0: i32) -> (i32, i32) {
    %c0_i32 = arith.constant 0 : i32
    %c0_i32_0 = arith.constant 0 : i32
    %c0_i32_1 = arith.constant 0 : i32
    return %c0_i32, %c0_i32_0 : i32, i32
  }
  func.func @transform_5(%arg0: i32) -> (i32, i32) {
    %c0_i32 = arith.constant 0 : i32
    %c0_i32_0 = arith.constant 0 : i32
    %c0_i32_1 = arith.constant 0 : i32
    return %c0_i32, %c0_i32_0 : i32, i32
  }
  func.func @transform_6(%arg0: i32) -> (i32, i32) {
    %c0_i32 = arith.constant 0 : i32
    %c0_i32_0 = arith.constant 0 : i32
    %c0_i32_1 = arith.constant 0 : i32
    return %c0_i32, %c0_i32_0 : i32, i32
  }
  func.func @transform_7(%arg0: i32) -> (i32, i32) {
    %c0_i32 = arith.constant 0 : i32
    %c0_i32_0 = arith.constant 0 : i32
    return %arg0, %c0_i32 : i32, i32
  }
}

</mosaic_0001>

<llo_original>
// kernel: sac_actor_forward.1
$region0: #{sac_actor_forward.1}
  #allocation0 [shape = 'u32[]', space=smem, size = 0x4, offset = 0x4, fixed_abs, tag = 'smem constant byte address 0x4 - core index']
  #allocation1 [shape = 'u32[144,128]{1,0:T(1,128)}', space=vmem, size = 0x12000, scoped, tag = 'internal scratch']
  %s0 = inlined_call_operand.vmem [shape: f32[8,24], index: 0, kind: input, shape index: {}]
  %s1 = inlined_call_operand.vmem [shape: bf16[24,256], index: 1, kind: input, shape index: {}]
  %s2 = inlined_call_operand.vmem [shape: f32[1,256], index: 2, kind: input, shape index: {}]
  %s3 = inlined_call_operand.hbm [shape: bf16[256,256], index: 3, kind: input, shape index: {}]
  %s4 = inlined_call_operand.vmem [shape: f32[1,256], index: 4, kind: input, shape index: {}]
  %s5 = inlined_call_operand.vmem [shape: bf16[256,8], index: 5, kind: input, shape index: {}]
  %s6 = inlined_call_operand.vmem [shape: f32[1,8], index: 6, kind: input, shape index: {}]
  %s7 = inlined_call_operand.vmem [shape: f32[8,8], index: 7, kind: output, shape index: {}]
  %s8 = sld [smem:[#allocation0]]
  $region42: #{sac_actor_forward.1} parent=0
    _
  %s10 = ssub.s32 1, %s8
  %s11 = scalar_select 0, %s10, %s8
  $region1: #{sac_actor_forward.1} parent=0
    #allocation2 [shape = 'u8[131072]{0}', space=vmem, size = 0x20000, scoped, tag = 'input window, operand 3, single buffered']
    #allocation3 [shape = 's32[1]{0}', space=sflag, size = 0x4, scoped, tag = 'scoped memory for sac_actor_forward.1']
    %12 = vsyncpa [#allocation3], 0
    // Predicated region
    $region2: #{sac_actor_forward.1} parent=1 // pred_check
      _
    $region3: #{sac_actor_forward.1} parent=1 // pred_check_branch
      %14 = sbr.rel (0) target = $region5
    $region4: #{sac_actor_forward.1} parent=1 // pred_region
      _
    $region5: #{sac_actor_forward.1} parent=1 // pred_fallthru
      _
    // Predicated region
    $region6: #{sac_actor_forward.1} parent=1 // pred_check
      _
    $region7: #{sac_actor_forward.1} parent=1 // pred_check_branch
      %16 = sbr.rel (0) target = $region9
    $region8: #{sac_actor_forward.1} parent=1 // pred_region
      _
    $region9: #{sac_actor_forward.1} parent=1 // pred_fallthru
      _
    // Predicated region
    $region10: #{sac_actor_forward.1} parent=1 // pred_check
      _
    $region11: #{sac_actor_forward.1} parent=1 // pred_check_branch
      %18 = sbr.rel (0) target = $region13
    $region12: #{sac_actor_forward.1} parent=1 // pred_region
      _
    $region13: #{sac_actor_forward.1} parent=1 // pred_fallthru
      _
    // Predicated region
    $region14: #{sac_actor_forward.1} parent=1 // pred_check
      _
    $region15: #{sac_actor_forward.1} parent=1 // pred_check_branch
      %20 = sbr.rel (0) target = $region17
    $region16: #{sac_actor_forward.1} parent=1 // pred_region
      %s22 = ssub.s32 4096, 4096
      %23 = vsyncadd [#allocation3], %s22
      %s24 = sshll.u32 [#allocation2], 4
      %s25 = int_to_ptr.vmem [resolvable:$true] %s24
      %30 = dma.hbm_to_vmem [thread:$0]  %s3, 4096, %s25, [#allocation3], 128, 128, 8
    $region17: #{sac_actor_forward.1} parent=1 // pred_fallthru
      _
    // Predicated region
    $region18: #{sac_actor_forward.1} parent=1 // pred_check
      _
    $region19: #{sac_actor_forward.1} parent=1 // pred_check_branch
      %32 = sbr.rel (0) target = $region21
    $region20: #{sac_actor_forward.1} parent=1 // pred_region
      _
    $region21: #{sac_actor_forward.1} parent=1 // pred_fallthru
      _
    // Predicated region
    $region22: #{sac_actor_forward.1} parent=1 // pred_check
      _
    $region23: #{sac_actor_forward.1} parent=1 // pred_check_branch
      %34 = sbr.rel (0) target = $region25
    $region24: #{sac_actor_forward.1} parent=1 // pred_region
      _
    $region25: #{sac_actor_forward.1} parent=1 // pred_fallthru
      _
    // Predicated region
    $region26: #{sac_actor_forward.1} parent=1 // pred_check
      _
    $region27: #{sac_actor_forward.1} parent=1 // pred_check_branch
      %36 = sbr.rel (0) target = $region29
    $region28: #{sac_actor_forward.1} parent=1 // pred_region
      _
    $region29: #{sac_actor_forward.1} parent=1 // pred_fallthru
      _
    // Predicated region
    $region30: #{sac_actor_forward.1} parent=1 // pred_check
      _
    $region31: #{sac_actor_forward.1} parent=1 // pred_check_branch
      %38 = sbr.rel (0) target = $region33
    $region32: #{sac_actor_forward.1} parent=1 // pred_region
      %39 = dma.done [#allocation3], 4096
    $region33: #{sac_actor_forward.1} parent=1 // pred_fallthru
      _
    %v41 = vld [vmem:[%s0] sm:$0xff]
    %v42 = vpack.c.bf16 %v41, %v41
    %v43 = vld [vmem:[%s1] sm:$0xff]
    %v44 = vld [vmem:[%s1 + $0x8] sm:$0xff]
    %v45 = vld [vmem:[%s1 + $0x10] sm:$0xff]
    %v46 = vld [vmem:[%s2] sm:$0x3]
    %v48 = vlaneseq
    %v49 = vshrl.u32 %v48, 7
    %v50 = vsub.s32 0, %v49
    %v51 = vrot.slane %v46, %v50
    %v52 = vlaneseq
    %v53 = vshrl.u32 %v52, 7
    %v54 = vsub.s32 1, %v53
    %v55 = vrot.slane %v46, %v54
    %v61 = vunpack.c.l.b16 %v43
    %v62 = vunpack.c.h.b16 %v43
    %v63 = vunpack.c.l.b16 %v44
    %v64 = vunpack.c.h.b16 %v44
    %v65 = vunpack.c.l.b16 %v45
    %v66 = vunpack.c.h.b16 %v45
    %v67 = vpack.c.b16 %v63, %v61
    %v68 = vpack.c.b16 %v64, %v62
    %v69 = vpack.c.b16 %v65, %v65
    %v70 = vpack.c.b16 %v66, %v66
    %vm73 = vcmask 195584
    %v75 = vsel %vm73, %v42, 0
    %vm77 = vcmask 1043456
    %v79 = vsel %vm77, %v69, 0
    %v82 = vsel %vm77, %v70, 0
    %84 = vmatprep.subr.bf16.mxu0 0
    %85 = vmatpush1.bf16.msra.mxu0 0
    %86 = vmatprep.subr.bf16.mxu0 0
    %87 = vmatpush1.bf16.msra.mxu0 0
    %88 = vmatprep.subr.bf16.mxu0 0
    %89 = vmatpush1.bf16.msra.mxu0 0
    %90 = vmatprep.subr.bf16.mxu0 0
    %91 = vmatpush1.bf16.msra.mxu0 0
    %92 = vmatprep.subr.bf16.mxu0 0
    %93 = vmatpush1.bf16.msra.mxu0 0
    %94 = vmatprep.subr.bf16.mxu0 0
    %95 = vmatpush1.bf16.msra.mxu0 0
    %96 = vmatprep.subr.bf16.mxu0 %v82
    %97 = vmatpush1.bf16.msra.mxu0 %v79
    %98 = vmatprep.subr.bf16.mxu0 %v68
    %99 = vmatpush1.bf16.msra.mxu0 %v67
    %100 = vmatprep.subr.bf16.mxu0 0
    %101 = vmatpush2.bf16.msra.mxu0 0
    %102 = vmatprep.subr.bf16.mxu0 0
    %103 = vmatpush2.bf16.msra.mxu0 0
    %104 = vmatprep.subr.bf16.mxu0 0
    %105 = vmatpush2.bf16.msra.mxu0 0
    %106 = vmatprep.subr.bf16.mxu0 0
    %107 = vmatpush2.bf16.msra.mxu0 0
    %108 = vmatprep.subr.bf16.mxu0 0
    %109 = vmatpush2.bf16.msra.mxu0 0
    %110 = vmatprep.subr.bf16.mxu0 0
    %111 = vmatpush2.bf16.msra.mxu0 0
    %112 = vmatprep.subr.bf16.mxu0 0
    %113 = vmatpush2.bf16.msra.mxu0 0
    %114 = vmatprep.subr.bf16.mxu0 0
    %115 = vmatpush2.bf16.msra.mxu0 0
    %116 = vmatprep.mubr.bf16.mxu0 0
    %117 = vmatmul.mubr.bf16.gmra.mxu0 %v75
    %v118 = vpop.f32.mrf.mxu0
    %v119 = vadd.f32 %v51, %v118
    %v120 = vpop.f32.mrf.mxu0
    %v121 = vadd.f32 %v55, %v120
    %v122 = vpop.f32.mrf.mxu0
    %v123 = vpop.f32.mrf.mxu0
    %124 = vdwg.mxu0
    %v125 = vmax.f32 %v119, 0.0
    %v126 = vmax.f32 %v121, 0.0
    %v127 = vpack.c.bf16 %v125, %v125
    %v128 = vpack.c.bf16 %v126, %v126
    %v129 = vld [vmem:[#allocation2] sm:$0xff]
    %v130 = vld [vmem:[#allocation2 + $0x8] sm:$0xff]
    %v131 = vld [vmem:[#allocation2 + $0x10] sm:$0xff]
    %v132 = vld [vmem:[#allocation2 + $0x18] sm:$0xff]
    %v133 = vld [vmem:[#allocation2 + $0x20] sm:$0xff]
    %v134 = vld [vmem:[#allocation2 + $0x28] sm:$0xff]
    %v135 = vld [vmem:[#allocation2 + $0x30] sm:$0xff]
    %v136 = vld [vmem:[#allocation2 + $0x38] sm:$0xff]
    %v137 = vld [vmem:[#allocation2 + $0x40] sm:$0xff]
    %v138 = vld [vmem:[#allocation2 + $0x48] sm:$0xff]
    %v139 = vld [vmem:[#allocation2 + $0x50] sm:$0xff]
    %v140 = vld [vmem:[#allocation2 + $0x58] sm:$0xff]
    %v141 = vld [vmem:[#allocation2 + $0x60] sm:$0xff]
    %v142 = vld [vmem:[#allocation2 + $0x68] sm:$0xff]
    %v143 = vld [vmem:[#allocation2 + $0x70] sm:$0xff]
    %v144 = vld [vmem:[#allocation2 + $0x78] sm:$0xff]
    %v145 = vld [vmem:[#allocation2 + $0x80] sm:$0xff]
    %v146 = vld [vmem:[#allocation2 + $0x88] sm:$0xff]
    %v147 = vld [vmem:[#allocation2 + $0x90] sm:$0xff]
    %v148 = vld [vmem:[#allocation2 + $0x98] sm:$0xff]
    %v149 = vld [vmem:[#allocation2 + $0xa0] sm:$0xff]
    %v150 = vld [vmem:[#allocation2 + $0xa8] sm:$0xff]
    %v151 = vld [vmem:[#allocation2 + $0xb0] sm:$0xff]
    %v152 = vld [vmem:[#allocation2 + $0xb8] sm:$0xff]
    %v153 = vld [vmem:[#allocation2 + $0xc0] sm:$0xff]
    %v154 = vld [vmem:[#allocation2 + $0xc8] sm:$0xff]
    %v155 = vld [vmem:[#allocation2 + $0xd0] sm:$0xff]
    %v156 = vld [vmem:[#allocation2 + $0xd8] sm:$0xff]
    %v157 = vld [vmem:[#allocation2 + $0xe0] sm:$0xff]
    %v158 = vld [vmem:[#allocation2 + $0xe8] sm:$0xff]
    %v159 = vld [vmem:[#allocation2 + $0xf0] sm:$0xff]
    %v160 = vld [vmem:[#allocation2 + $0xf8] sm:$0xff]
    %v161 = vld [vmem:[%s4] sm:$0x3]
    %v163 = vlaneseq
    %v164 = vshrl.u32 %v163, 7
    %v165 = vsub.s32 0, %v164
    %v166 = vrot.slane %v161, %v165
    %v167 = vlaneseq
    %v168 = vshrl.u32 %v167, 7
    %v169 = vsub.s32 1, %v168
    %v170 = vrot.slane %v161, %v169
    %v205 = vunpack.c.l.b16 %v129
    %v206 = vunpack.c.h.b16 %v129
    %v207 = vunpack.c.l.b16 %v130
    %v208 = vunpack.c.h.b16 %v130
    %v209 = vunpack.c.l.b16 %v131
    %v210 = vunpack.c.h.b16 %v131
    %v211 = vunpack.c.l.b16 %v132
    %v212 = vunpack.c.h.b16 %v132
    %v213 = vunpack.c.l.b16 %v133
    %v214 = vunpack.c.h.b16 %v133
    %v215 = vunpack.c.l.b16 %v134
    %v216 = vunpack.c.h.b16 %v134
    %v217 = vunpack.c.l.b16 %v135
    %v218 = vunpack.c.h.b16 %v135
    %v219 = vunpack.c.l.b16 %v136
    %v220 = vunpack.c.h.b16 %v136
    %v221 = vunpack.c.l.b16 %v137
    %v222 = vunpack.c.h.b16 %v137
    %v223 = vunpack.c.l.b16 %v138
    %v224 = vunpack.c.h.b16 %v138
    %v225 = vunpack.c.l.b16 %v139
    %v226 = vunpack.c.h.b16 %v139
    %v227 = vunpack.c.l.b16 %v140
    %v228 = vunpack.c.h.b16 %v140
    %v229 = vunpack.c.l.b16 %v141
    %v230 = vunpack.c.h.b16 %v141
    %v231 = vunpack.c.l.b16 %v142
    %v232 = vunpack.c.h.b16 %v142
    %v233 = vunpack.c.l.b16 %v143
    %v234 = vunpack.c.h.b16 %v143
    %v235 = vunpack.c.l.b16 %v144
    %v236 = vunpack.c.h.b16 %v144
    %v237 = vunpack.c.l.b16 %v145
    %v238 = vunpack.c.h.b16 %v145
    %v239 = vunpack.c.l.b16 %v146
    %v240 = vunpack.c.h.b16 %v146
    %v241 = vunpack.c.l.b16 %v147
    %v242 = vunpack.c.h.b16 %v147
    %v243 = vunpack.c.l.b16 %v148
    %v244 = vunpack.c.h.b16 %v148
    %v245 = vunpack.c.l.b16 %v149
    %v246 = vunpack.c.h.b16 %v149
    %v247 = vunpack.c.l.b16 %v150
    %v248 = vunpack.c.h.b16 %v150
    %v249 = vunpack.c.l.b16 %v151
    %v250 = vunpack.c.h.b16 %v151
    %v251 = vunpack.c.l.b16 %v152
    %v252 = vunpack.c.h.b16 %v152
    %v253 = vunpack.c.l.b16 %v153
    %v254 = vunpack.c.h.b16 %v153
    %v255 = vunpack.c.l.b16 %v154
    %v256 = vunpack.c.h.b16 %v154
    %v257 = vunpack.c.l.b16 %v155
    %v258 = vunpack.c.h.b16 %v155
    %v259 = vunpack.c.l.b16 %v156
    %v260 = vunpack.c.h.b16 %v156
    %v261 = vunpack.c.l.b16 %v157
    %v262 = vunpack.c.h.b16 %v157
    %v263 = vunpack.c.l.b16 %v158
    %v264 = vunpack.c.h.b16 %v158
    %v265 = vunpack.c.l.b16 %v159
    %v266 = vunpack.c.h.b16 %v159
    %v267 = vunpack.c.l.b16 %v160
    %v268 = vunpack.c.h.b16 %v160
    %v269 = vpack.c.b16 %v207, %v205
    %v270 = vpack.c.b16 %v208, %v206
    %v271 = vpack.c.b16 %v211, %v209
    %v272 = vpack.c.b16 %v212, %v210
    %v273 = vpack.c.b16 %v215, %v213
    %v274 = vpack.c.b16 %v216, %v214
    %v275 = vpack.c.b16 %v219, %v217
    %v276 = vpack.c.b16 %v220, %v218
    %v277 = vpack.c.b16 %v223, %v221
    %v278 = vpack.c.b16 %v224, %v222
    %v279 = vpack.c.b16 %v227, %v225
    %v280 = vpack.c.b16 %v228, %v226
    %v281 = vpack.c.b16 %v231, %v229
    %v282 = vpack.c.b16 %v232, %v230
    %v283 = vpack.c.b16 %v235, %v233
    %v284 = vpack.c.b16 %v236, %v234
    %v285 = vpack.c.b16 %v239, %v237
    %v286 = vpack.c.b16 %v240, %v238
    %v287 = vpack.c.b16 %v243, %v241
    %v288 = vpack.c.b16 %v244, %v242
    %v289 = vpack.c.b16 %v247, %v245
    %v290 = vpack.c.b16 %v248, %v246
    %v291 = vpack.c.b16 %v251, %v249
    %v292 = vpack.c.b16 %v252, %v250
    %v293 = vpack.c.b16 %v255, %v253
    %v294 = vpack.c.b16 %v256, %v254
    %v295 = vpack.c.b16 %v259, %v257
    %v296 = vpack.c.b16 %v260, %v258
    %v297 = vpack.c.b16 %v263, %v261
    %v298 = vpack.c.b16 %v264, %v262
    %v299 = vpack.c.b16 %v267, %v265
    %v300 = vpack.c.b16 %v268, %v266
    %333 = vmatprep.subr.bf16.mxu0 %v284
    %334 = vmatpush1.bf16.msra.mxu0 %v283
    %335 = vmatprep.subr.bf16.mxu0 %v282
    %336 = vmatpush1.bf16.msra.mxu0 %v281
    %337 = vmatprep.subr.bf16.mxu0 %v280
    %338 = vmatpush1.bf16.msra.mxu0 %v279
    %339 = vmatprep.subr.bf16.mxu0 %v278
    %340 = vmatpush1.bf16.msra.mxu0 %v277
    %341 = vmatprep.subr.bf16.mxu0 %v276
    %342 = vmatpush1.bf16.msra.mxu0 %v275
    %343 = vmatprep.subr.bf16.mxu0 %v274
    %344 = vmatpush1.bf16.msra.mxu0 %v273
    %345 = vmatprep.subr.bf16.mxu0 %v272
    %346 = vmatpush1.bf16.msra.mxu0 %v271
    %347 = vmatprep.subr.bf16.mxu0 %v270
    %348 = vmatpush1.bf16.msra.mxu0 %v269
    %349 = vmatprep.subr.bf16.mxu0 %v300
    %350 = vmatpush2.bf16.msra.mxu0 %v299
    %351 = vmatprep.subr.bf16.mxu0 %v298
    %352 = vmatpush2.bf16.msra.mxu0 %v297
    %353 = vmatprep.subr.bf16.mxu0 %v296
    %354 = vmatpush2.bf16.msra.mxu0 %v295
    %355 = vmatprep.subr.bf16.mxu0 %v294
    %356 = vmatpush2.bf16.msra.mxu0 %v293
    %357 = vmatprep.subr.bf16.mxu0 %v292
    %358 = vmatpush2.bf16.msra.mxu0 %v291
    %359 = vmatprep.subr.bf16.mxu0 %v290
    %360 = vmatpush2.bf16.msra.mxu0 %v289
    %361 = vmatprep.subr.bf16.mxu0 %v288
    %362 = vmatpush2.bf16.msra.mxu0 %v287
    %363 = vmatprep.subr.bf16.mxu0 %v286
    %364 = vmatpush2.bf16.msra.mxu0 %v285
    %365 = vmatprep.mubr.bf16.mxu0 %v128
    %366 = vmatmul.mubr.bf16.gmra.mxu0 %v127
    %v367 = vpop.f32.mrf.mxu0
    %v368 = vadd.f32 %v166, %v367
    %v369 = vpop.f32.mrf.mxu0
    %v370 = vadd.f32 %v170, %v369
    %v371 = vpop.f32.mrf.mxu0
    %v372 = vpop.f32.mrf.mxu0
    %373 = vdwg.mxu0
    %v374 = vmax.f32 %v368, 0.0
    %v375 = vmax.f32 %v370, 0.0
    %v376 = vpack.c.bf16 %v374, %v374
    %v377 = vpack.c.bf16 %v375, %v375
    %v378 = vld [vmem:[%s5] sm:$0xf]
    %v379 = vld [vmem:[%s5 + $0x4] sm:$0xf]
    %v380 = vld [vmem:[%s5 + $0x8] sm:$0xf]
    %v381 = vld [vmem:[%s5 + $0xc] sm:$0xf]
    %v382 = vld [vmem:[%s5 + $0x10] sm:$0xf]
    %v383 = vld [vmem:[%s5 + $0x14] sm:$0xf]
    %v384 = vld [vmem:[%s5 + $0x18] sm:$0xf]
    %v385 = vld [vmem:[%s5 + $0x1c] sm:$0xf]
    %v386 = vld [vmem:[%s5 + $0x20] sm:$0xf]
    %v387 = vld [vmem:[%s5 + $0x24] sm:$0xf]
    %v388 = vld [vmem:[%s5 + $0x28] sm:$0xf]
    %v389 = vld [vmem:[%s5 + $0x2c] sm:$0xf]
    %v390 = vld [vmem:[%s5 + $0x30] sm:$0xf]
    %v391 = vld [vmem:[%s5 + $0x34] sm:$0xf]
    %v392 = vld [vmem:[%s5 + $0x38] sm:$0xf]
    %v393 = vld [vmem:[%s5 + $0x3c] sm:$0xf]
    %v394 = vld [vmem:[%s5 + $0x40] sm:$0xf]
    %v395 = vld [vmem:[%s5 + $0x44] sm:$0xf]
    %v396 = vld [vmem:[%s5 + $0x48] sm:$0xf]
    %v397 = vld [vmem:[%s5 + $0x4c] sm:$0xf]
    %v398 = vld [vmem:[%s5 + $0x50] sm:$0xf]
    %v399 = vld [vmem:[%s5 + $0x54] sm:$0xf]
    %v400 = vld [vmem:[%s5 + $0x58] sm:$0xf]
    %v401 = vld [vmem:[%s5 + $0x5c] sm:$0xf]
    %v402 = vld [vmem:[%s5 + $0x60] sm:$0xf]
    %v403 = vld [vmem:[%s5 + $0x64] sm:$0xf]
    %v404 = vld [vmem:[%s5 + $0x68] sm:$0xf]
    %v405 = vld [vmem:[%s5 + $0x6c] sm:$0xf]
    %v406 = vld [vmem:[%s5 + $0x70] sm:$0xf]
    %v407 = vld [vmem:[%s5 + $0x74] sm:$0xf]
    %v408 = vld [vmem:[%s5 + $0x78] sm:$0xf]
    %v409 = vld [vmem:[%s5 + $0x7c] sm:$0xf]
    %v410 = vld [vmem:[%s6] sm:$0x1]
    %v412 = vlaneseq
    %v413 = vshrl.u32 %v412, 7
    %v414 = vsub.s32 0, %v413
    %v415 = vrot.slane %v410, %v414
    %v449 = vunpack.c.l.b16 %v378
    %v450 = vunpack.c.l.b16 %v379
    %v451 = vunpack.c.l.b16 %v380
    %v452 = vunpack.c.l.b16 %v381
    %v453 = vunpack.c.l.b16 %v382
    %v454 = vunpack.c.l.b16 %v383
    %v455 = vunpack.c.l.b16 %v384
    %v456 = vunpack.c.l.b16 %v385
    %v457 = vunpack.c.l.b16 %v386
    %v458 = vunpack.c.l.b16 %v387
    %v459 = vunpack.c.l.b16 %v388
    %v460 = vunpack.c.l.b16 %v389
    %v461 = vunpack.c.l.b16 %v390
    %v462 = vunpack.c.l.b16 %v391
    %v463 = vunpack.c.l.b16 %v392
    %v464 = vunpack.c.l.b16 %v393
    %v465 = vunpack.c.l.b16 %v394
    %v466 = vunpack.c.l.b16 %v395
    %v467 = vunpack.c.l.b16 %v396
    %v468 = vunpack.c.l.b16 %v397
    %v469 = vunpack.c.l.b16 %v398
    %v470 = vunpack.c.l.b16 %v399
    %v471 = vunpack.c.l.b16 %v400
    %v472 = vunpack.c.l.b16 %v401
    %v473 = vunpack.c.l.b16 %v402
    %v474 = vunpack.c.l.b16 %v403
    %v475 = vunpack.c.l.b16 %v404
    %v476 = vunpack.c.l.b16 %v405
    %v477 = vunpack.c.l.b16 %v406
    %v478 = vunpack.c.l.b16 %v407
    %v479 = vunpack.c.l.b16 %v408
    %v480 = vunpack.c.l.b16 %v409
    %v481 = vpack.c.b16 %v450, %v449
    %v482 = vpack.c.b16 %v452, %v451
    %v483 = vpack.c.b16 %v454, %v453
    %v484 = vpack.c.b16 %v456, %v455
    %v485 = vpack.c.b16 %v458, %v457
    %v486 = vpack.c.b16 %v460, %v459
    %v487 = vpack.c.b16 %v462, %v461
    %v488 = vpack.c.b16 %v464, %v463
    %v489 = vpack.c.b16 %v466, %v465
    %v490 = vpack.c.b16 %v468, %v467
    %v491 = vpack.c.b16 %v470, %v469
    %v492 = vpack.c.b16 %v472, %v471
    %v493 = vpack.c.b16 %v474, %v473
    %v494 = vpack.c.b16 %v476, %v475
    %v495 = vpack.c.b16 %v478, %v477
    %v496 = vpack.c.b16 %v480, %v479
    %513 = vmatprep.subr.bf16.mxu0 0
    %514 = vmatpush1.bf16.msra.mxu0 %v488
    %515 = vmatprep.subr.bf16.mxu0 0
    %516 = vmatpush1.bf16.msra.mxu0 %v487
    %517 = vmatprep.subr.bf16.mxu0 0
    %518 = vmatpush1.bf16.msra.mxu0 %v486
    %519 = vmatprep.subr.bf16.mxu0 0
    %520 = vmatpush1.bf16.msra.mxu0 %v485
    %521 = vmatprep.subr.bf16.mxu0 0
    %522 = vmatpush1.bf16.msra.mxu0 %v484
    %523 = vmatprep.subr.bf16.mxu0 0
    %524 = vmatpush1.bf16.msra.mxu0 %v483
    %525 = vmatprep.subr.bf16.mxu0 0
    %526 = vmatpush1.bf16.msra.mxu0 %v482
    %527 = vmatprep.subr.bf16.mxu0 0
    %528 = vmatpush1.bf16.msra.mxu0 %v481
    %529 = vmatprep.subr.bf16.mxu0 0
    %530 = vmatpush2.bf16.msra.mxu0 %v496
    %531 = vmatprep.subr.bf16.mxu0 0
    %532 = vmatpush2.bf16.msra.mxu0 %v495
    %533 = vmatprep.subr.bf16.mxu0 0
    %534 = vmatpush2.bf16.msra.mxu0 %v494
    %535 = vmatprep.subr.bf16.mxu0 0
    %536 = vmatpush2.bf16.msra.mxu0 %v493
    %537 = vmatprep.subr.bf16.mxu0 0
    %538 = vmatpush2.bf16.msra.mxu0 %v492
    %539 = vmatprep.subr.bf16.mxu0 0
    %540 = vmatpush2.bf16.msra.mxu0 %v491
    %541 = vmatprep.subr.bf16.mxu0 0
    %542 = vmatpush2.bf16.msra.mxu0 %v490
    %543 = vmatprep.subr.bf16.mxu0 0
    %544 = vmatpush2.bf16.msra.mxu0 %v489
    %545 = vmatprep.mubr.bf16.mxu0 %v377
    %546 = vmatmul.mubr.bf16.gmra.mxu0 %v376
    %v547 = vpop.f32.mrf.mxu0
    %v548 = vadd.f32 %v415, %v547
    %v549 = vpop.f32.mrf.mxu0
    %v550 = vpop.f32.mrf.mxu0
    %v551 = vpop.f32.mrf.mxu0
    %552 = vdwg.mxu0
    %v553 = vlaneseq
    %v554 = vand.u32 %v553, 127
    %v555 = vmax.f32 %v548, -20.0
    %v556 = vmin.f32 %v555, 2.0
    %vm557 = vcmp.ge.s32.totalorder %v554, 4
    %v558 = vsel %vm557, %v556, %v548
    %vm559 = vcmask 64512
    %560 = vst.msk [vmem:[%s7] sm:$0xff] %vm559, %v558
    // Predicated region
    $region34: #{sac_actor_forward.1} parent=1 // pred_check
      _
    $region35: #{sac_actor_forward.1} parent=1 // pred_check_branch
      %562 = sbr.rel (0) target = $region37
    $region36: #{sac_actor_forward.1} parent=1 // pred_region
      _
    $region37: #{sac_actor_forward.1} parent=1 // pred_fallthru
      _
    // Predicated region
    $region38: #{sac_actor_forward.1} parent=1 // pred_check
      _
    $region39: #{sac_actor_forward.1} parent=1 // pred_check_branch
      %564 = sbr.rel (0) target = $region41
    $region40: #{sac_actor_forward.1} parent=1 // pred_region
      _
    $region41: #{sac_actor_forward.1} parent=1 // pred_fallthru
      _
    %565 = vsyncpa [#allocation3], 1

</llo_original>
